<compile_context>
chip_gen: v7x
topology: tpu7x:2x2x1
jax: 0.10.0
libtpu: 0.0.40
codegen_flags: <defaults>
</compile_context>

<pallas_src>
import functools
import math

import jax
import jax.numpy as jnp
from jax.experimental import pallas as pl
from jax.experimental.pallas import tpu as pltpu


def _triplet_wrt_kernel(xc_ref, xa_ref, sqc_ref, sqa_ref, tc_ref, ta_ref, vc_ref,
                        diff_ref, m_sc, zap_sc, nap_sc, zan_sc, nan_sc,
                        *, bounded_dist):
    """One (TN comparison rows) x (TM anchor columns) tile of the WRT forward.

    xc_ref  : (TN, D_pad)  bf16/f32  comparison features (streamed over grid axis 1)
    xa_ref  : (D_pad, TM)  bf16/f32  anchor features, pre-transposed in the wrapper
    sqc_ref : (TN, 1)  f32  squared L2 norms of comparison rows
    sqa_ref : (1, TM)  f32  squared L2 norms of anchor rows
    tc_ref  : (TN, 1)  i32  labels of comparison rows
    ta_ref  : (1, TM)  i32  labels of anchor rows
    vc_ref  : (TN, 1)  f32  validity mask of comparison rows (0 for padding)
    diff_ref: (1, TM)  f32  output: closest_negative - furthest_positive (lane-dense)
    scratch : five (1, TM) f32 running accumulators carried across grid axis 1:
              m (row max of dist_ap), z_ap, num_ap, z_an, num_an.
    """
    j = pl.program_id(1)

    @pl.when(j == 0)
    def _init():
        # Reference max_v = max(dist * mask) over a row, which includes the zeros at
        # masked positions and dist_ap >= 0 everywhere, so 0 is the exact init.
        m_sc[...] = jnp.zeros_like(m_sc)
        zap_sc[...] = jnp.zeros_like(zap_sc)
        nap_sc[...] = jnp.zeros_like(nap_sc)
        zan_sc[...] = jnp.zeros_like(zan_sc)
        nan_sc[...] = jnp.zeros_like(nan_sc)

    # (TN, TM) Gram tile on the MXU with f32 accumulation; no in-kernel transpose.
    gram = jnp.dot(xc_ref[...], xa_ref[...], preferred_element_type=jnp.float32)
    dist = jnp.sqrt(jnp.maximum(sqc_ref[...] + sqa_ref[...] - 2.0 * gram, 1e-12))

    valid = vc_ref[...]                                       # (TN, 1)
    eq = (tc_ref[...] == ta_ref[...]).astype(jnp.float32)     # (TN, TM)
    is_pos = eq * valid
    is_neg = valid - is_pos

    dist_ap = dist * is_pos
    dist_an = dist * is_neg

    # Single merged exp: pos / neg supports are disjoint, so one exp of
    # (dist_ap - dist_an - shift*is_pos) serves both softmax numerators.
    if bounded_dist:
        # Normalized features => dist <= 2; exp cannot overflow, skip the shift.
        e = jnp.exp(dist_ap - dist_an)
        e_ap = e * is_pos
        e_an = e * is_neg
        zap_sc[...] += jnp.sum(e_ap, axis=0, keepdims=True)
        nap_sc[...] += jnp.sum(dist * e_ap, axis=0, keepdims=True)
    else:
        # Online max + rescale on the positive branch (matches the reference's
        # row-max shift exactly, including the +1e-6 added in the shifted space).
        m_old = m_sc[...]
        m_new = jnp.maximum(m_old, jnp.max(dist_ap, axis=0, keepdims=True))
        alpha = jnp.exp(m_old - m_new)                        # (1, TM), tiny EUP op
        e = jnp.exp(dist_ap - dist_an - m_new * is_pos)
        e_ap = e * is_pos
        e_an = e * is_neg
        zap_sc[...] = zap_sc[...] * alpha + jnp.sum(e_ap, axis=0, keepdims=True)
        nap_sc[...] = nap_sc[...] * alpha + jnp.sum(dist * e_ap, axis=0, keepdims=True)
        m_sc[...] = m_new

    # Negative branch: the reference shift max(-dist_an * is_neg) is identically 0
    # (masked entries contribute 0, unmasked entries are <= 0), so no shift/rescale.
    zan_sc[...] += jnp.sum(e_an, axis=0, keepdims=True)
    nan_sc[...] += jnp.sum(dist * e_an, axis=0, keepdims=True)

    @pl.when(j == pl.num_programs(1) - 1)
    def _finish():
        fp = nap_sc[...] / (zap_sc[...] + 1e-6)    # furthest_positive
        cn = nan_sc[...] / (zan_sc[...] + 1e-6)    # closest_negative
        diff_ref[...] = cn - fp                    # lane-dense (1, TM) store


def _round_up(v, m):
    return (v + m - 1) // m * m


def triplet_loss_wrt(inputs, targets, normalize_feature=False,
                     block_rows=256, block_cols=512, use_bf16_gram=True):
    """Forward pass of TripletLoss_WRT.

    inputs: (N, D) float features, targets: (N,) int labels (assumed >= 0).
    block_rows: anchor tile (lanes). 256 matches the 256-tall MXU on v6e/v7x;
                128 is the natural choice on v5e.
    block_cols: comparison tile (sublanes) streamed over the reduction axis.
    Returns (loss, correct) as device scalars (f32, i32) -- `correct` stays on
    device instead of the reference's `.item()` host sync.
    """
    inputs = jnp.asarray(inputs, jnp.float32)
    targets = jnp.asarray(targets, jnp.int32)
    n, d = inputs.shape

    if normalize_feature:
        # x / (||x||_2 + 1e-12): one O(N*D) pass, negligible vs the O(N^2*D) kernel.
        norm = jnp.sqrt(jnp.sum(inputs * inputs, axis=-1, keepdims=True))
        inputs = inputs / (norm + 1e-12)

    tm = min(block_rows, _round_up(n, 128))
    tn = min(block_cols, _round_up(n, 128))
    lcm = tm * tn // math.gcd(tm, tn)
    n_pad = _round_up(n, lcm)
    d_pad = max(_round_up(d, 128), 128)

    # Lane-dense padded operands. Zero feature padding does not perturb norms/dots;
    # padded rows are excluded via the validity mask and sliced off below.
    x_pad = jnp.zeros((n_pad, d_pad), jnp.float32).at[:n, :d].set(inputs)
    sq = jnp.sum(x_pad * x_pad, axis=1)                     # f32 squared norms
    t_pad = jnp.full((n_pad,), -1, jnp.int32).at[:n].set(targets)
    valid = (jnp.arange(n_pad) < n).astype(jnp.float32)

    mxu_dtype = jnp.bfloat16 if use_bf16_gram else jnp.float32
    x_comp = x_pad.astype(mxu_dtype)                        # (N_pad, D_pad)
    xt_anch = x_pad.T.astype(mxu_dtype)                     # (D_pad, N_pad), one-time transpose

    sq_comp = sq.reshape(n_pad, 1)
    sq_anch = sq.reshape(1, n_pad)
    t_comp = t_pad.reshape(n_pad, 1)
    t_anch = t_pad.reshape(1, n_pad)
    valid_comp = valid.reshape(n_pad, 1)

    kernel = functools.partial(_triplet_wrt_kernel, bounded_dist=normalize_feature)

    grid = (n_pad // tm, n_pad // tn)
    diff = pl.pallas_call(
        kernel,
        grid=grid,
        in_specs=[
            pl.BlockSpec((tn, d_pad), lambda i, j: (j, 0)),   # comparison features (streamed)
            pl.BlockSpec((d_pad, tm), lambda i, j: (0, i)),   # anchor features (pre-transposed)
            pl.BlockSpec((tn, 1), lambda i, j: (j, 0)),       # ||x_comp||^2
            pl.BlockSpec((1, tm), lambda i, j: (0, i)),       # ||x_anchor||^2
            pl.BlockSpec((tn, 1), lambda i, j: (j, 0)),       # comparison labels
            pl.BlockSpec((1, tm), lambda i, j: (0, i)),       # anchor labels
            pl.BlockSpec((tn, 1), lambda i, j: (j, 0)),       # comparison validity mask
        ],
        out_specs=pl.BlockSpec((1, tm), lambda i, j: (0, i)),
        out_shape=jax.ShapeDtypeStruct((1, n_pad), jnp.float32),
        scratch_shapes=[pltpu.VMEM((1, tm), jnp.float32)] * 5,
        compiler_params=pltpu.CompilerParams(
            dimension_semantics=("parallel", "arbitrary")),
    )(x_comp, xt_anch, sq_comp, sq_anch, t_comp, t_anch, valid_comp)

    diff = diff[0, :n]
    # nn.SoftMarginLoss(diff, y=1) = mean(log(1 + exp(-diff))), overflow-stable form.
    loss = jnp.mean(jnp.logaddexp(0.0, -diff))
    correct = jnp.sum((diff >= 0.0).astype(jnp.int32))
    return loss, correct


if __name__ == "__main__":
    key = jax.random.PRNGKey(0)
    N, D = 8, 32                           # 4 identities x 2 samples each
    x = jax.random.normal(key, (N, D), dtype=jnp.float32)
    targets = jnp.array([0, 0, 1, 1, 2, 2, 3, 3], dtype=jnp.int32)

    # Unbounded path (online-max branch).
    loss, correct = triplet_loss_wrt(x, targets, normalize_feature=False)
    jax.block_until_ready((loss, correct))

    # Normalized-feature path (bounded, shift-free branch).
    loss_n, correct_n = triplet_loss_wrt(x, targets, normalize_feature=True)
    jax.block_until_ready((loss_n, correct_n))

    print("KERNEL_OK")
</pallas_src>

<mosaic_0001>
module attributes {stable_mosaic.version = 11 : i64} {
  func.func @_triplet_wrt_kernel(%arg0: i32, %arg1: i32, %arg2: memref<128x128xbf16, #tpu.memory_space<vmem>>, %arg3: memref<128x128xbf16, #tpu.memory_space<vmem>>, %arg4: memref<128x1xf32, #tpu.memory_space<vmem>>, %arg5: memref<1x128xf32, #tpu.memory_space<vmem>>, %arg6: memref<128x1xi32, #tpu.memory_space<vmem>>, %arg7: memref<1x128xi32, #tpu.memory_space<vmem>>, %arg8: memref<128x1xf32, #tpu.memory_space<vmem>>, %arg9: memref<1x128xf32, #tpu.memory_space<vmem>>, %arg10: memref<1x128xf32, #tpu.memory_space<vmem>>, %arg11: memref<1x128xf32, #tpu.memory_space<vmem>>, %arg12: memref<1x128xf32, #tpu.memory_space<vmem>>, %arg13: memref<1x128xf32, #tpu.memory_space<vmem>>, %arg14: memref<1x128xf32, #tpu.memory_space<vmem>>) attributes {dimension_semantics = [#tpu.dimension_semantics<parallel>, #tpu.dimension_semantics<arbitrary>], iteration_bounds = array<i64: 1, 1>, scalar_prefetch = 0 : i64, scratch_operands = 5 : i64, tpu.core_type = #tpu.core_type<tc>, window_params = [{transform_indices = @transform_0, window_bounds = array<i64: 128, 128>}, {transform_indices = @transform_1, window_bounds = array<i64: 128, 128>}, {transform_indices = @transform_2, window_bounds = array<i64: 128, 1>}, {transform_indices = @transform_3, window_bounds = array<i64: 1, 128>}, {transform_indices = @transform_4, window_bounds = array<i64: 128, 1>}, {transform_indices = @transform_5, window_bounds = array<i64: 1, 128>}, {transform_indices = @transform_6, window_bounds = array<i64: 128, 1>}, {transform_indices = @transform_7, window_bounds = array<i64: 1, 128>}]} {
    %c0_i32 = arith.constant 0 : i32
    %0 = arith.cmpi eq, %arg1, %c0_i32 : i32
    %1 = arith.extui %0 : i1 to i32
    %c0_i32_0 = arith.constant 0 : i32
    %2 = arith.cmpi ne, %1, %c0_i32_0 : i32
    scf.if %2 {
      %cst_43 = arith.constant 0.000000e+00 : f32
      %72 = vector.broadcast %cst_43 : f32 to vector<1x128xf32>
      %c0_44 = arith.constant 0 : index
      %c0_45 = arith.constant 0 : index
      %73 = vector.load %arg10[%c0_44, %c0_45] : memref<1x128xf32, #tpu.memory_space<vmem>>, vector<1x128xf32>
      tpu.vector_store %arg10[%c0_44, %c0_45], %72 {strides = array<i32>} : memref<1x128xf32, #tpu.memory_space<vmem>>, vector<1x128xf32>,
      %cst_46 = arith.constant 0.000000e+00 : f32
      %74 = vector.broadcast %cst_46 : f32 to vector<1x128xf32>
      %c0_47 = arith.constant 0 : index
      %c0_48 = arith.constant 0 : index
      %75 = vector.load %arg11[%c0_47, %c0_48] : memref<1x128xf32, #tpu.memory_space<vmem>>, vector<1x128xf32>
      tpu.vector_store %arg11[%c0_47, %c0_48], %74 {strides = array<i32>} : memref<1x128xf32, #tpu.memory_space<vmem>>, vector<1x128xf32>,
      %cst_49 = arith.constant 0.000000e+00 : f32
      %76 = vector.broadcast %cst_49 : f32 to vector<1x128xf32>
      %c0_50 = arith.constant 0 : index
      %c0_51 = arith.constant 0 : index
      %77 = vector.load %arg12[%c0_50, %c0_51] : memref<1x128xf32, #tpu.memory_space<vmem>>, vector<1x128xf32>
      tpu.vector_store %arg12[%c0_50, %c0_51], %76 {strides = array<i32>} : memref<1x128xf32, #tpu.memory_space<vmem>>, vector<1x128xf32>,
      %cst_52 = arith.constant 0.000000e+00 : f32
      %78 = vector.broadcast %cst_52 : f32 to vector<1x128xf32>
      %c0_53 = arith.constant 0 : index
      %c0_54 = arith.constant 0 : index
      %79 = vector.load %arg13[%c0_53, %c0_54] : memref<1x128xf32, #tpu.memory_space<vmem>>, vector<1x128xf32>
      tpu.vector_store %arg13[%c0_53, %c0_54], %78 {strides = array<i32>} : memref<1x128xf32, #tpu.memory_space<vmem>>, vector<1x128xf32>,
      %cst_55 = arith.constant 0.000000e+00 : f32
      %80 = vector.broadcast %cst_55 : f32 to vector<1x128xf32>
      %c0_56 = arith.constant 0 : index
      %c0_57 = arith.constant 0 : index
      %81 = vector.load %arg14[%c0_56, %c0_57] : memref<1x128xf32, #tpu.memory_space<vmem>>, vector<1x128xf32>
      tpu.vector_store %arg14[%c0_56, %c0_57], %80 {strides = array<i32>} : memref<1x128xf32, #tpu.memory_space<vmem>>, vector<1x128xf32>,
    } else {
    }
    %c0 = arith.constant 0 : index
    %c0_1 = arith.constant 0 : index
    %3 = vector.load %arg2[%c0, %c0_1] : memref<128x128xbf16, #tpu.memory_space<vmem>>, vector<128x128xbf16>
    %c0_2 = arith.constant 0 : index
    %c0_3 = arith.constant 0 : index
    %4 = vector.load %arg3[%c0_2, %c0_3] : memref<128x128xbf16, #tpu.memory_space<vmem>>, vector<128x128xbf16>
    %cst = arith.constant dense<0.000000e+00> : vector<128x128xf32>
    %5 = tpu.matmul %3, %4, %cst {dimension_numbers = #tpu.dot_dimension_numbers<[1], [0], [0], [1], [0, 0, 1, 1], [], []>} : vector<128x128xbf16>, vector<128x128xbf16>, vector<128x128xf32> -> vector<128x128xf32>
    %c0_4 = arith.constant 0 : index
    %c0_5 = arith.constant 0 : index
    %6 = vector.load %arg4[%c0_4, %c0_5] : memref<128x1xf32, #tpu.memory_space<vmem>>, vector<128x1xf32>
    %c0_6 = arith.constant 0 : index
    %c0_7 = arith.constant 0 : index
    %7 = vector.load %arg5[%c0_6, %c0_7] : memref<1x128xf32, #tpu.memory_space<vmem>>, vector<1x128xf32>
    %8 = vector.broadcast %6 : vector<128x1xf32> to vector<128x128xf32>
    %9 = vector.broadcast %7 : vector<1x128xf32> to vector<128x128xf32>
    %10 = arith.addf %8, %9 : vector<128x128xf32>
    %cst_8 = arith.constant 2.000000e+00 : f32
    %11 = vector.broadcast %cst_8 : f32 to vector<128x128xf32>
    %12 = arith.mulf %11, %5 : vector<128x128xf32>
    %13 = arith.subf %10, %12 : vector<128x128xf32>
    %cst_9 = arith.constant 9.99999996E-13 : f32
    %14 = vector.broadcast %cst_9 : f32 to vector<128x128xf32>
    %15 = arith.maximumf %13, %14 : vector<128x128xf32>
    %16 = math.sqrt %15 : vector<128x128xf32>
    %c0_10 = arith.constant 0 : index
    %c0_11 = arith.constant 0 : index
    %17 = vector.load %arg8[%c0_10, %c0_11] : memref<128x1xf32, #tpu.memory_space<vmem>>, vector<128x1xf32>
    %c0_12 = arith.constant 0 : index
    %c0_13 = arith.constant 0 : index
    %18 = vector.load %arg6[%c0_12, %c0_13] : memref<128x1xi32, #tpu.memory_space<vmem>>, vector<128x1xi32>
    %c0_14 = arith.constant 0 : index
    %c0_15 = arith.constant 0 : index
    %19 = vector.load %arg7[%c0_14, %c0_15] : memref<1x128xi32, #tpu.memory_space<vmem>>, vector<1x128xi32>
    %20 = vector.broadcast %18 : vector<128x1xi32> to vector<128x128xi32>
    %21 = vector.broadcast %19 : vector<1x128xi32> to vector<128x128xi32>
    %22 = arith.cmpi eq, %20, %21 : vector<128x128xi32>
    %23 = arith.extui %22 : vector<128x128xi1> to vector<128x128xi32>
    %24 = arith.sitofp %23 : vector<128x128xi32> to vector<128x128xf32>
    %25 = vector.broadcast %17 : vector<128x1xf32> to vector<128x128xf32>
    %26 = arith.mulf %24, %25 : vector<128x128xf32>
    %27 = vector.broadcast %17 : vector<128x1xf32> to vector<128x128xf32>
    %28 = arith.subf %27, %26 : vector<128x128xf32>
    %29 = arith.mulf %16, %26 : vector<128x128xf32>
    %30 = arith.mulf %16, %28 : vector<128x128xf32>
    %c0_16 = arith.constant 0 : index
    %c0_17 = arith.constant 0 : index
    %31 = vector.load %arg10[%c0_16, %c0_17] : memref<1x128xf32, #tpu.memory_space<vmem>>, vector<1x128xf32>
    %cst_18 = arith.constant dense<0xFF800000> : vector<128xf32>
    %32 = vector.multi_reduction <maximumf>, %29, %cst_18 [0] : vector<128x128xf32> to vector<128xf32>
    %33 = vector.shape_cast %32 : vector<128xf32> to vector<1x128xf32>
    %34 = arith.maximumf %31, %33 : vector<1x128xf32>
    %35 = arith.subf %31, %34 : vector<1x128xf32>
    %36 = math.exp %35 : vector<1x128xf32>
    %37 = arith.subf %29, %30 : vector<128x128xf32>
    %38 = vector.broadcast %34 : vector<1x128xf32> to vector<128x128xf32>
    %39 = arith.mulf %38, %26 : vector<128x128xf32>
    %40 = arith.subf %37, %39 : vector<128x128xf32>
    %41 = math.exp %40 : vector<128x128xf32>
    %42 = arith.mulf %41, %26 : vector<128x128xf32>
    %43 = arith.mulf %41, %28 : vector<128x128xf32>
    %c0_19 = arith.constant 0 : index
    %c0_20 = arith.constant 0 : index
    %44 = vector.load %arg11[%c0_19, %c0_20] : memref<1x128xf32, #tpu.memory_space<vmem>>, vector<1x128xf32>
    %45 = arith.mulf %44, %36 : vector<1x128xf32>
    %cst_21 = arith.constant dense<0.000000e+00> : vector<128xf32>
    %46 = vector.multi_reduction <add>, %42, %cst_21 [0] : vector<128x128xf32> to vector<128xf32>
    %47 = vector.shape_cast %46 : vector<128xf32> to vector<1x128xf32>
    %48 = arith.addf %45, %47 : vector<1x128xf32>
    %c0_22 = arith.constant 0 : index
    %c0_23 = arith.constant 0 : index
    %49 = vector.load %arg11[%c0_22, %c0_23] : memref<1x128xf32, #tpu.memory_space<vmem>>, vector<1x128xf32>
    tpu.vector_store %arg11[%c0_22, %c0_23], %48 {strides = array<i32>} : memref<1x128xf32, #tpu.memory_space<vmem>>, vector<1x128xf32>,
    %c0_24 = arith.constant 0 : index
    %c0_25 = arith.constant 0 : index
    %50 = vector.load %arg12[%c0_24, %c0_25] : memref<1x128xf32, #tpu.memory_space<vmem>>, vector<1x128xf32>
    %51 = arith.mulf %50, %36 : vector<1x128xf32>
    %52 = arith.mulf %16, %42 : vector<128x128xf32>
    %cst_26 = arith.constant dense<0.000000e+00> : vector<128xf32>
    %53 = vector.multi_reduction <add>, %52, %cst_26 [0] : vector<128x128xf32> to vector<128xf32>
    %54 = vector.shape_cast %53 : vector<128xf32> to vector<1x128xf32>
    %55 = arith.addf %51, %54 : vector<1x128xf32>
    %c0_27 = arith.constant 0 : index
    %c0_28 = arith.constant 0 : index
    %56 = vector.load %arg12[%c0_27, %c0_28] : memref<1x128xf32, #tpu.memory_space<vmem>>, vector<1x128xf32>
    tpu.vector_store %arg12[%c0_27, %c0_28], %55 {strides = array<i32>} : memref<1x128xf32, #tpu.memory_space<vmem>>, vector<1x128xf32>,
    %c0_29 = arith.constant 0 : index
    %c0_30 = arith.constant 0 : index
    %57 = vector.load %arg10[%c0_29, %c0_30] : memref<1x128xf32, #tpu.memory_space<vmem>>, vector<1x128xf32>
    tpu.vector_store %arg10[%c0_29, %c0_30], %34 {strides = array<i32>} : memref<1x128xf32, #tpu.memory_space<vmem>>, vector<1x128xf32>,
    %c0_31 = arith.constant 0 : index
    %c0_32 = arith.constant 0 : index
    %58 = vector.load %arg13[%c0_31, %c0_32] : memref<1x128xf32, #tpu.memory_space<vmem>>, vector<1x128xf32>
    %cst_33 = arith.constant dense<0.000000e+00> : vector<128xf32>
    %59 = vector.multi_reduction <add>, %43, %cst_33 [0] : vector<128x128xf32> to vector<128xf32>
    %60 = vector.shape_cast %59 : vector<128xf32> to vector<1x128xf32>
    %61 = arith.addf %58, %60 : vector<1x128xf32>
    %c0_34 = arith.constant 0 : index
    %c0_35 = arith.constant 0 : index
    %62 = vector.load %arg13[%c0_34, %c0_35] : memref<1x128xf32, #tpu.memory_space<vmem>>, vector<1x128xf32>
    tpu.vector_store %arg13[%c0_34, %c0_35], %61 {strides = array<i32>} : memref<1x128xf32, #tpu.memory_space<vmem>>, vector<1x128xf32>,
    %c0_36 = arith.constant 0 : index
    %c0_37 = arith.constant 0 : index
    %63 = vector.load %arg14[%c0_36, %c0_37] : memref<1x128xf32, #tpu.memory_space<vmem>>, vector<1x128xf32>
    %64 = arith.mulf %16, %43 : vector<128x128xf32>
    %cst_38 = arith.constant dense<0.000000e+00> : vector<128xf32>
    %65 = vector.multi_reduction <add>, %64, %cst_38 [0] : vector<128x128xf32> to vector<128xf32>
    %66 = vector.shape_cast %65 : vector<128xf32> to vector<1x128xf32>
    %67 = arith.addf %63, %66 : vector<1x128xf32>
    %c0_39 = arith.constant 0 : index
    %c0_40 = arith.constant 0 : index
    %68 = vector.load %arg14[%c0_39, %c0_40] : memref<1x128xf32, #tpu.memory_space<vmem>>, vector<1x128xf32>
    tpu.vector_store %arg14[%c0_39, %c0_40], %67 {strides = array<i32>} : memref<1x128xf32, #tpu.memory_space<vmem>>, vector<1x128xf32>,
    %c0_i32_41 = arith.constant 0 : i32
    %69 = arith.cmpi eq, %arg1, %c0_i32_41 : i32
    %70 = arith.extui %69 : i1 to i32
    %c0_i32_42 = arith.constant 0 : i32
    %71 = arith.cmpi ne, %70, %c0_i32_42 : i32
    scf.if %71 {
      %c0_43 = arith.constant 0 : index
      %c0_44 = arith.constant 0 : index
      %72 = vector.load %arg12[%c0_43, %c0_44] : memref<1x128xf32, #tpu.memory_space<vmem>>, vector<1x128xf32>
      %c0_45 = arith.constant 0 : index
      %c0_46 = arith.constant 0 : index
      %73 = vector.load %arg11[%c0_45, %c0_46] : memref<1x128xf32, #tpu.memory_space<vmem>>, vector<1x128xf32>
      %cst_47 = arith.constant 9.99999997E-7 : f32
      %74 = vector.broadcast %cst_47 : f32 to vector<1x128xf32>
      %75 = arith.addf %73, %74 : vector<1x128xf32>
      %76 = arith.divf %72, %75 : vector<1x128xf32>
      %c0_48 = arith.constant 0 : index
      %c0_49 = arith.constant 0 : index
      %77 = vector.load %arg14[%c0_48, %c0_49] : memref<1x128xf32, #tpu.memory_space<vmem>>, vector<1x128xf32>
      %c0_50 = arith.constant 0 : index
      %c0_51 = arith.constant 0 : index
      %78 = vector.load %arg13[%c0_50, %c0_51] : memref<1x128xf32, #tpu.memory_space<vmem>>, vector<1x128xf32>
      %cst_52 = arith.constant 9.99999997E-7 : f32
      %79 = vector.broadcast %cst_52 : f32 to vector<1x128xf32>
      %80 = arith.addf %78, %79 : vector<1x128xf32>
      %81 = arith.divf %77, %80 : vector<1x128xf32>
      %82 = arith.subf %81, %76 : vector<1x128xf32>
      %c0_53 = arith.constant 0 : index
      %c0_54 = arith.constant 0 : index
      %83 = vector.load %arg9[%c0_53, %c0_54] : memref<1x128xf32, #tpu.memory_space<vmem>>, vector<1x128xf32>
      tpu.vector_store %arg9[%c0_53, %c0_54], %82 {strides = array<i32>} : memref<1x128xf32, #tpu.memory_space<vmem>>, vector<1x128xf32>,
    } else {
    }
    return
  }
  func.func @transform_0(%arg0: i32, %arg1: i32) -> (i32, i32) {
    %c0_i32 = arith.constant 0 : i32
    %c0_i32_0 = arith.constant 0 : i32
    return %arg1, %c0_i32 : i32, i32
  }
  func.func @transform_1(%arg0: i32, %arg1: i32) -> (i32, i32) {
    %c0_i32 = arith.constant 0 : i32
    %c0_i32_0 = arith.constant 0 : i32
    return %c0_i32, %arg0 : i32, i32
  }
  func.func @transform_2(%arg0: i32, %arg1: i32) -> (i32, i32) {
    %c0_i32 = arith.constant 0 : i32
    %c0_i32_0 = arith.constant 0 : i32
    return %arg1, %c0_i32 : i32, i32
  }
  func.func @transform_3(%arg0: i32, %arg1: i32) -> (i32, i32) {
    %c0_i32 = arith.constant 0 : i32
    %c0_i32_0 = arith.constant 0 : i32
    return %c0_i32, %arg0 : i32, i32
  }
  func.func @transform_4(%arg0: i32, %arg1: i32) -> (i32, i32) {
    %c0_i32 = arith.constant 0 : i32
    %c0_i32_0 = arith.constant 0 : i32
    return %arg1, %c0_i32 : i32, i32
  }
  func.func @transform_5(%arg0: i32, %arg1: i32) -> (i32, i32) {
    %c0_i32 = arith.constant 0 : i32
    %c0_i32_0 = arith.constant 0 : i32
    return %c0_i32, %arg0 : i32, i32
  }
  func.func @transform_6(%arg0: i32, %arg1: i32) -> (i32, i32) {
    %c0_i32 = arith.constant 0 : i32
    %c0_i32_0 = arith.constant 0 : i32
    return %arg1, %c0_i32 : i32, i32
  }
  func.func @transform_7(%arg0: i32, %arg1: i32) -> (i32, i32) {
    %c0_i32 = arith.constant 0 : i32
    %c0_i32_0 = arith.constant 0 : i32
    return %c0_i32, %arg0 : i32, i32
  }
}

</mosaic_0001>

<llo_original>
// kernel: tpu_custom_call.1
$region0: #{tpu_custom_call.1}
  #allocation0 [shape = 'u32[]', space=smem, size = 0x4, offset = 0x4, fixed_abs, tag = 'smem constant byte address 0x4 - core index']
  #allocation1 [shape = 'u32[144,128]{1,0:T(1,128)}', space=vmem, size = 0x12000, scoped, tag = 'internal scratch']
  #allocation2 [shape = 'f32[1,128]{1,0:T(1,128)}', space=vmem, size = 0x200, scoped, tag = 'scratch operand']
  #allocation3 [shape = 'f32[1,128]{1,0:T(1,128)}', space=vmem, size = 0x200, scoped, tag = 'scratch operand']
  #allocation4 [shape = 'f32[1,128]{1,0:T(1,128)}', space=vmem, size = 0x200, scoped, tag = 'scratch operand']
  #allocation5 [shape = 'f32[1,128]{1,0:T(1,128)}', space=vmem, size = 0x200, scoped, tag = 'scratch operand']
  #allocation6 [shape = 'f32[1,128]{1,0:T(1,128)}', space=vmem, size = 0x200, scoped, tag = 'scratch operand']
  %s0 = inlined_call_operand.vmem [shape: bf16[128,128], index: 0, kind: input, shape index: {}]
  %s1 = inlined_call_operand.vmem [shape: bf16[128,128], index: 1, kind: input, shape index: {}]
  %s2 = inlined_call_operand.vmem [shape: f32[128,1], index: 2, kind: input, shape index: {}]
  %s3 = inlined_call_operand.vmem [shape: f32[1,128], index: 3, kind: input, shape index: {}]
  %s4 = inlined_call_operand.vmem [shape: s32[128,1], index: 4, kind: input, shape index: {}]
  %s5 = inlined_call_operand.vmem [shape: s32[1,128], index: 5, kind: input, shape index: {}]
  %s6 = inlined_call_operand.vmem [shape: f32[128,1], index: 6, kind: input, shape index: {}]
  %s7 = inlined_call_operand.hbm [shape: f32[1,128], index: 7, kind: output, shape index: {}]
  %s8 = sld [smem:[#allocation0]]
  $region46: #{tpu_custom_call.1} parent=0
    _
  %s10 = ssub.s32 1, %s8
  %s11 = scalar_select 0, %s10, %s8
  $region1: #{tpu_custom_call.1} parent=0
    #allocation7 [shape = 'u8[512]{0}', space=vmem, size = 0x400, scoped, tag = 'output window, operand 0, single buffered']
    #allocation8 [shape = 's32[1]{0}', space=sflag, size = 0x4, scoped, tag = 'scoped memory for tpu_custom_call.1']
    %12 = vsyncpa [#allocation8], 0
    // Predicated region
    $region2: #{tpu_custom_call.1} parent=1 // pred_check
      _
    $region3: #{tpu_custom_call.1} parent=1 // pred_check_branch
      %14 = sbr.rel (0) target = $region5
    $region4: #{tpu_custom_call.1} parent=1 // pred_region
      _
    $region5: #{tpu_custom_call.1} parent=1 // pred_fallthru
      _
    // Predicated region
    $region6: #{tpu_custom_call.1} parent=1 // pred_check
      _
    $region7: #{tpu_custom_call.1} parent=1 // pred_check_branch
      %16 = sbr.rel (0) target = $region9
    $region8: #{tpu_custom_call.1} parent=1 // pred_region
      _
    $region9: #{tpu_custom_call.1} parent=1 // pred_fallthru
      _
    // Predicated region
    $region10: #{tpu_custom_call.1} parent=1 // pred_check
      _
    $region11: #{tpu_custom_call.1} parent=1 // pred_check_branch
      %18 = sbr.rel (0) target = $region13
    $region12: #{tpu_custom_call.1} parent=1 // pred_region
      _
    $region13: #{tpu_custom_call.1} parent=1 // pred_fallthru
      _
    // Predicated region
    $region14: #{tpu_custom_call.1} parent=1 // pred_check
      _
    $region15: #{tpu_custom_call.1} parent=1 // pred_check_branch
      %20 = sbr.rel (0) target = $region17
    $region16: #{tpu_custom_call.1} parent=1 // pred_region
      _
    $region17: #{tpu_custom_call.1} parent=1 // pred_fallthru
      _
    // Predicated region
    $region18: #{tpu_custom_call.1} parent=1 // pred_check
      _
    $region19: #{tpu_custom_call.1} parent=1 // pred_check_branch
      %22 = sbr.rel (0) target = $region21
    $region20: #{tpu_custom_call.1} parent=1 // pred_region
      _
    $region21: #{tpu_custom_call.1} parent=1 // pred_fallthru
      _
    // Predicated region
    $region22: #{tpu_custom_call.1} parent=1 // pred_check
      _
    $region23: #{tpu_custom_call.1} parent=1 // pred_check_branch
      %24 = sbr.rel (0) target = $region25
    $region24: #{tpu_custom_call.1} parent=1 // pred_region
      _
    $region25: #{tpu_custom_call.1} parent=1 // pred_fallthru
      _
    // Predicated region
    $region26: #{tpu_custom_call.1} parent=1 // pred_check
      _
    $region27: #{tpu_custom_call.1} parent=1 // pred_check_branch
      %26 = sbr.rel (0) target = $region29
    $region28: #{tpu_custom_call.1} parent=1 // pred_region
      _
    $region29: #{tpu_custom_call.1} parent=1 // pred_fallthru
      _
    %p28 = scmp.eq.s32.totalorder 0, 0
    // Predicated region
    $region30: #{tpu_custom_call.1} parent=1 // pred_check
      %p29 = pneg %p28
    $region31: #{tpu_custom_call.1} parent=1 // pred_check_branch
      %31 = sbr.rel (%p29) target = $region33
    $region32: #{tpu_custom_call.1} parent=1 // pred_region
      %32 = vst [vmem:[#allocation2] sm:$0x1] 0.0
      %33 = vst [vmem:[#allocation3] sm:$0x1] 0.0
      %34 = vst [vmem:[#allocation4] sm:$0x1] 0.0
      %35 = vst [vmem:[#allocation5] sm:$0x1] 0.0
      %36 = vst [vmem:[#allocation6] sm:$0x1] 0.0
    $region33: #{tpu_custom_call.1} parent=1 // pred_fallthru
      _
    %v37 = vld [vmem:[%s0] sm:$0xf]
    %v38 = vld [vmem:[%s0 + $0x4] sm:$0xf]
    %v39 = vld [vmem:[%s0 + $0x8] sm:$0xf]
    %v40 = vld [vmem:[%s0 + $0xc] sm:$0xf]
    %v41 = vld [vmem:[%s0 + $0x10] sm:$0xf]
    %v42 = vld [vmem:[%s0 + $0x14] sm:$0xf]
    %v43 = vld [vmem:[%s0 + $0x18] sm:$0xf]
    %v44 = vld [vmem:[%s0 + $0x1c] sm:$0xf]
    %v45 = vld [vmem:[%s0 + $0x20] sm:$0xf]
    %v46 = vld [vmem:[%s0 + $0x24] sm:$0xf]
    %v47 = vld [vmem:[%s0 + $0x28] sm:$0xf]
    %v48 = vld [vmem:[%s0 + $0x2c] sm:$0xf]
    %v49 = vld [vmem:[%s0 + $0x30] sm:$0xf]
    %v50 = vld [vmem:[%s0 + $0x34] sm:$0xf]
    %v51 = vld [vmem:[%s0 + $0x38] sm:$0xf]
    %v52 = vld [vmem:[%s0 + $0x3c] sm:$0xf]
    %v53 = vld [vmem:[%s1] sm:$0xf]
    %v54 = vld [vmem:[%s1 + $0x4] sm:$0xf]
    %v55 = vld [vmem:[%s1 + $0x8] sm:$0xf]
    %v56 = vld [vmem:[%s1 + $0xc] sm:$0xf]
    %v57 = vld [vmem:[%s1 + $0x10] sm:$0xf]
    %v58 = vld [vmem:[%s1 + $0x14] sm:$0xf]
    %v59 = vld [vmem:[%s1 + $0x18] sm:$0xf]
    %v60 = vld [vmem:[%s1 + $0x1c] sm:$0xf]
    %v61 = vld [vmem:[%s1 + $0x20] sm:$0xf]
    %v62 = vld [vmem:[%s1 + $0x24] sm:$0xf]
    %v63 = vld [vmem:[%s1 + $0x28] sm:$0xf]
    %v64 = vld [vmem:[%s1 + $0x2c] sm:$0xf]
    %v65 = vld [vmem:[%s1 + $0x30] sm:$0xf]
    %v66 = vld [vmem:[%s1 + $0x34] sm:$0xf]
    %v67 = vld [vmem:[%s1 + $0x38] sm:$0xf]
    %v68 = vld [vmem:[%s1 + $0x3c] sm:$0xf]
    %v85 = vunpack.c.l.b16 %v37
    %v86 = vunpack.c.l.b16 %v38
    %v87 = vunpack.c.l.b16 %v39
    %v88 = vunpack.c.l.b16 %v40
    %v89 = vunpack.c.l.b16 %v41
    %v90 = vunpack.c.l.b16 %v42
    %v91 = vunpack.c.l.b16 %v43
    %v92 = vunpack.c.l.b16 %v44
    %v93 = vunpack.c.l.b16 %v45
    %v94 = vunpack.c.l.b16 %v46
    %v95 = vunpack.c.l.b16 %v47
    %v96 = vunpack.c.l.b16 %v48
    %v97 = vunpack.c.l.b16 %v49
    %v98 = vunpack.c.l.b16 %v50
    %v99 = vunpack.c.l.b16 %v51
    %v100 = vunpack.c.l.b16 %v52
    %v101 = vpack.c.b16 %v86, %v85
    %v102 = vpack.c.b16 %v88, %v87
    %v103 = vpack.c.b16 %v90, %v89
    %v104 = vpack.c.b16 %v92, %v91
    %v105 = vpack.c.b16 %v94, %v93
    %v106 = vpack.c.b16 %v96, %v95
    %v107 = vpack.c.b16 %v98, %v97
    %v108 = vpack.c.b16 %v100, %v99
    %v133 = vunpack.c.l.b16 %v53
    %v134 = vunpack.c.l.b16 %v54
    %v135 = vunpack.c.l.b16 %v55
    %v136 = vunpack.c.l.b16 %v56
    %v137 = vunpack.c.l.b16 %v57
    %v138 = vunpack.c.l.b16 %v58
    %v139 = vunpack.c.l.b16 %v59
    %v140 = vunpack.c.l.b16 %v60
    %v141 = vunpack.c.l.b16 %v61
    %v142 = vunpack.c.l.b16 %v62
    %v143 = vunpack.c.l.b16 %v63
    %v144 = vunpack.c.l.b16 %v64
    %v145 = vunpack.c.l.b16 %v65
    %v146 = vunpack.c.l.b16 %v66
    %v147 = vunpack.c.l.b16 %v67
    %v148 = vunpack.c.l.b16 %v68
    %v149 = vpack.c.b16 %v134, %v133
    %v150 = vpack.c.b16 %v136, %v135
    %v151 = vpack.c.b16 %v138, %v137
    %v152 = vpack.c.b16 %v140, %v139
    %v153 = vpack.c.b16 %v142, %v141
    %v154 = vpack.c.b16 %v144, %v143
    %v155 = vpack.c.b16 %v146, %v145
    %v156 = vpack.c.b16 %v148, %v147
    %165 = vmatprep.subr.bf16.mxu0 0
    %166 = vmatpush1.bf16.msra.mxu0 %v149
    %167 = vmatprep.subr.bf16.mxu0 0
    %168 = vmatpush1.bf16.msra.mxu0 %v150
    %169 = vmatprep.subr.bf16.mxu0 0
    %170 = vmatpush1.bf16.msra.mxu0 %v151
    %171 = vmatprep.subr.bf16.mxu0 0
    %172 = vmatpush1.bf16.msra.mxu0 %v152
    %173 = vmatprep.subr.bf16.mxu0 0
    %174 = vmatpush1.bf16.msra.mxu0 %v153
    %175 = vmatprep.subr.bf16.mxu0 0
    %176 = vmatpush1.bf16.msra.mxu0 %v154
    %177 = vmatprep.subr.bf16.mxu0 0
    %178 = vmatpush1.bf16.msra.mxu0 %v155
    %179 = vmatprep.subr.bf16.mxu0 0
    %180 = vmatpush1.bf16.msra.mxu0 %v156
    %181 = vmatprep.subr.bf16.mxu0 0
    %182 = vmatpush1.bf16.msra.mxu0 0
    %183 = vmatprep.subr.bf16.mxu0 0
    %184 = vmatpush1.bf16.msra.mxu0 0
    %185 = vmatprep.subr.bf16.mxu0 0
    %186 = vmatpush1.bf16.msra.mxu0 0
    %187 = vmatprep.subr.bf16.mxu0 0
    %188 = vmatpush1.bf16.msra.mxu0 0
    %189 = vmatprep.subr.bf16.mxu0 0
    %190 = vmatpush1.bf16.msra.mxu0 0
    %191 = vmatprep.subr.bf16.mxu0 0
    %192 = vmatpush1.bf16.msra.mxu0 0
    %193 = vmatprep.subr.bf16.mxu0 0
    %194 = vmatpush1.bf16.msra.mxu0 0
    %195 = vmatprep.subr.bf16.mxu0 0
    %196 = vmatpush1.bf16.msra.mxu0 0
    %197 = vmatprep.mubr.bf16.mxu0 0
    %198 = vmatmul.mubr.bf16.gmra.mrb[0].mxu0 %v101
    %v199 = vpop.f32.mrb[0].mxu0
    %v200 = vadd.f32 0.0, %v199
    %v201 = vpop.f32.mrb[0].mxu0
    %v202 = vpop.f32.mrb[0].mxu0
    %v203 = vadd.f32 0.0, %v202
    %v204 = vpop.f32.mrb[0].mxu0
    %205 = vmatprep.mubr.bf16.mxu0 0
    %206 = vmatmul.mubr.bf16.gmra.mrb[0].mxu0 %v102
    %v207 = vpop.f32.mrb[0].mxu0
    %v208 = vadd.f32 0.0, %v207
    %v209 = vpop.f32.mrb[0].mxu0
    %v210 = vpop.f32.mrb[0].mxu0
    %v211 = vadd.f32 0.0, %v210
    %v212 = vpop.f32.mrb[0].mxu0
    %213 = vmatprep.mubr.bf16.mxu0 0
    %214 = vmatmul.mubr.bf16.gmra.mrb[0].mxu0 %v103
    %v215 = vpop.f32.mrb[0].mxu0
    %v216 = vadd.f32 0.0, %v215
    %v217 = vpop.f32.mrb[0].mxu0
    %v218 = vpop.f32.mrb[0].mxu0
    %v219 = vadd.f32 0.0, %v218
    %v220 = vpop.f32.mrb[0].mxu0
    %221 = vmatprep.mubr.bf16.mxu0 0
    %222 = vmatmul.mubr.bf16.gmra.mrb[0].mxu0 %v104
    %v223 = vpop.f32.mrb[0].mxu0
    %v224 = vadd.f32 0.0, %v223
    %v225 = vpop.f32.mrb[0].mxu0
    %v226 = vpop.f32.mrb[0].mxu0
    %v227 = vadd.f32 0.0, %v226
    %v228 = vpop.f32.mrb[0].mxu0
    %229 = vmatprep.mubr.bf16.mxu0 0
    %230 = vmatmul.mubr.bf16.gmra.mrb[0].mxu0 %v105
    %v231 = vpop.f32.mrb[0].mxu0
    %v232 = vadd.f32 0.0, %v231
    %v233 = vpop.f32.mrb[0].mxu0
    %v234 = vpop.f32.mrb[0].mxu0
    %v235 = vadd.f32 0.0, %v234
    %v236 = vpop.f32.mrb[0].mxu0
    %237 = vmatprep.mubr.bf16.mxu0 0
    %238 = vmatmul.mubr.bf16.gmra.mrb[0].mxu0 %v106
    %v239 = vpop.f32.mrb[0].mxu0
    %v240 = vadd.f32 0.0, %v239
    %v241 = vpop.f32.mrb[0].mxu0
    %v242 = vpop.f32.mrb[0].mxu0
    %v243 = vadd.f32 0.0, %v242
    %v244 = vpop.f32.mrb[0].mxu0
    %245 = vmatprep.mubr.bf16.mxu0 0
    %246 = vmatmul.mubr.bf16.gmra.mrb[0].mxu0 %v107
    %v247 = vpop.f32.mrb[0].mxu0
    %v248 = vadd.f32 0.0, %v247
    %v249 = vpop.f32.mrb[0].mxu0
    %v250 = vpop.f32.mrb[0].mxu0
    %v251 = vadd.f32 0.0, %v250
    %v252 = vpop.f32.mrb[0].mxu0
    %253 = vmatprep.mubr.bf16.mxu0 0
    %254 = vmatmul.mubr.bf16.gmra.mrb[0].mxu0 %v108
    %v255 = vpop.f32.mrb[0].mxu0
    %v256 = vadd.f32 0.0, %v255
    %v257 = vpop.f32.mrb[0].mxu0
    %v258 = vpop.f32.mrb[0].mxu0
    %v259 = vadd.f32 0.0, %v258
    %v260 = vpop.f32.mrb[0].mxu0
    %261 = vdwg.mxu0
    %v262 = vld [vmem:[%s2] sm:$0xff]
    %v263 = vld [vmem:[%s2 + $0x8] sm:$0xff]
    %v264 = vld [vmem:[%s2 + $0x10] sm:$0xff]
    %v265 = vld [vmem:[%s2 + $0x18] sm:$0xff]
    %v266 = vld [vmem:[%s2 + $0x20] sm:$0xff]
    %v267 = vld [vmem:[%s2 + $0x28] sm:$0xff]
    %v268 = vld [vmem:[%s2 + $0x30] sm:$0xff]
    %v269 = vld [vmem:[%s2 + $0x38] sm:$0xff]
    %v270 = vld [vmem:[%s2 + $0x40] sm:$0xff]
    %v271 = vld [vmem:[%s2 + $0x48] sm:$0xff]
    %v272 = vld [vmem:[%s2 + $0x50] sm:$0xff]
    %v273 = vld [vmem:[%s2 + $0x58] sm:$0xff]
    %v274 = vld [vmem:[%s2 + $0x60] sm:$0xff]
    %v275 = vld [vmem:[%s2 + $0x68] sm:$0xff]
    %v276 = vld [vmem:[%s2 + $0x70] sm:$0xff]
    %v277 = vld [vmem:[%s2 + $0x78] sm:$0xff]
    %v278 = vld [vmem:[%s3] sm:$0x1]
    %280 = vset.pattern.permute.xlu0 0
    %281 = vperm.xlu0 %280, %v262
    %v282 = vpop.permute.xlu0 %281
    %285 = vset.pattern.permute.xlu0 0
    %286 = vperm.xlu0 %285, %v263
    %v287 = vpop.permute.xlu0 %286
    %290 = vset.pattern.permute.xlu0 0
    %291 = vperm.xlu0 %290, %v264
    %v292 = vpop.permute.xlu0 %291
    %295 = vset.pattern.permute.xlu0 0
    %296 = vperm.xlu0 %295, %v265
    %v297 = vpop.permute.xlu0 %296
    %300 = vset.pattern.permute.xlu0 0
    %301 = vperm.xlu0 %300, %v266
    %v302 = vpop.permute.xlu0 %301
    %305 = vset.pattern.permute.xlu0 0
    %306 = vperm.xlu0 %305, %v267
    %v307 = vpop.permute.xlu0 %306
    %310 = vset.pattern.permute.xlu0 0
    %311 = vperm.xlu0 %310, %v268
    %v312 = vpop.permute.xlu0 %311
    %315 = vset.pattern.permute.xlu0 0
    %316 = vperm.xlu0 %315, %v269
    %v317 = vpop.permute.xlu0 %316
    %320 = vset.pattern.permute.xlu0 0
    %321 = vperm.xlu0 %320, %v270
    %v322 = vpop.permute.xlu0 %321
    %325 = vset.pattern.permute.xlu0 0
    %326 = vperm.xlu0 %325, %v271
    %v327 = vpop.permute.xlu0 %326
    %330 = vset.pattern.permute.xlu0 0
    %331 = vperm.xlu0 %330, %v272
    %v332 = vpop.permute.xlu0 %331
    %335 = vset.pattern.permute.xlu0 0
    %336 = vperm.xlu0 %335, %v273
    %v337 = vpop.permute.xlu0 %336
    %340 = vset.pattern.permute.xlu0 0
    %341 = vperm.xlu0 %340, %v274
    %v342 = vpop.permute.xlu0 %341
    %345 = vset.pattern.permute.xlu0 0
    %346 = vperm.xlu0 %345, %v275
    %v347 = vpop.permute.xlu0 %346
    %350 = vset.pattern.permute.xlu0 0
    %351 = vperm.xlu0 %350, %v276
    %v352 = vpop.permute.xlu0 %351
    %355 = vset.pattern.permute.xlu0 0
    %356 = vperm.xlu0 %355, %v277
    %v357 = vpop.permute.xlu0 %356
    %v360 = vlaneseq
    %v361 = vshrl.u32 %v360, 7
    %v362 = vsub.s32 0, %v361
    %v363 = vrot.slane %v278, %v362
    %v365 = vadd.f32 %v282, %v363
    %v366 = vadd.f32 %v287, %v363
    %v367 = vadd.f32 %v292, %v363
    %v368 = vadd.f32 %v297, %v363
    %v369 = vadd.f32 %v302, %v363
    %v370 = vadd.f32 %v307, %v363
    %v371 = vadd.f32 %v312, %v363
    %v372 = vadd.f32 %v317, %v363
    %v373 = vadd.f32 %v322, %v363
    %v374 = vadd.f32 %v327, %v363
    %v375 = vadd.f32 %v332, %v363
    %v376 = vadd.f32 %v337, %v363
    %v377 = vadd.f32 %v342, %v363
    %v378 = vadd.f32 %v347, %v363
    %v379 = vadd.f32 %v352, %v363
    %v380 = vadd.f32 %v357, %v363
    %v381 = vmul.f32 %v200, 2.0
    %v382 = vmul.f32 %v203, 2.0
    %v383 = vmul.f32 %v208, 2.0
    %v384 = vmul.f32 %v211, 2.0
    %v385 = vmul.f32 %v216, 2.0
    %v386 = vmul.f32 %v219, 2.0
    %v387 = vmul.f32 %v224, 2.0
    %v388 = vmul.f32 %v227, 2.0
    %v389 = vmul.f32 %v232, 2.0
    %v390 = vmul.f32 %v235, 2.0
    %v391 = vmul.f32 %v240, 2.0
    %v392 = vmul.f32 %v243, 2.0
    %v393 = vmul.f32 %v248, 2.0
    %v394 = vmul.f32 %v251, 2.0
    %v395 = vmul.f32 %v256, 2.0
    %v396 = vmul.f32 %v259, 2.0
    %v397 = vsub.f32 %v365, %v381
    %v398 = vsub.f32 %v366, %v382
    %v399 = vsub.f32 %v367, %v383
    %v400 = vsub.f32 %v368, %v384
    %v401 = vsub.f32 %v369, %v385
    %v402 = vsub.f32 %v370, %v386
    %v403 = vsub.f32 %v371, %v387
    %v404 = vsub.f32 %v372, %v388
    %v405 = vsub.f32 %v373, %v389
    %v406 = vsub.f32 %v374, %v390
    %v407 = vsub.f32 %v375, %v391
    %v408 = vsub.f32 %v376, %v392
    %v409 = vsub.f32 %v377, %v393
    %v410 = vsub.f32 %v378, %v394
    %v411 = vsub.f32 %v379, %v395
    %v412 = vsub.f32 %v380, %v396
    %v413 = vmax.f32 %v397, 1e-12
    %v414 = vmax.f32 %v398, 1e-12
    %v415 = vmax.f32 %v399, 1e-12
    %v416 = vmax.f32 %v400, 1e-12
    %v417 = vmax.f32 %v401, 1e-12
    %v418 = vmax.f32 %v402, 1e-12
    %v419 = vmax.f32 %v403, 1e-12
    %v420 = vmax.f32 %v404, 1e-12
    %v421 = vmax.f32 %v405, 1e-12
    %v422 = vmax.f32 %v406, 1e-12
    %v423 = vmax.f32 %v407, 1e-12
    %v424 = vmax.f32 %v408, 1e-12
    %v425 = vmax.f32 %v409, 1e-12
    %v426 = vmax.f32 %v410, 1e-12
    %v427 = vmax.f32 %v411, 1e-12
    %v428 = vmax.f32 %v412, 1e-12
    %v429 = vrsqrt.pop %v413
    %v430 = vmul.f32 %v413, %v429
    %vm431 = vcmp.eq.f32.partialorder %v413, inf
    %v432 = vsel %vm431, %v413, %v430
    %vm433 = vcmp.eq.f32.partialorder %v413, 0.0
    %v434 = vand.u32 %v413, 2147483648
    %v435 = vsel %vm433, %v434, %v432
    %v436 = vrsqrt.pop %v414
    %v437 = vmul.f32 %v414, %v436
    %vm438 = vcmp.eq.f32.partialorder %v414, inf
    %v439 = vsel %vm438, %v414, %v437
    %vm440 = vcmp.eq.f32.partialorder %v414, 0.0
    %v441 = vand.u32 %v414, 2147483648
    %v442 = vsel %vm440, %v441, %v439
    %v443 = vrsqrt.pop %v415
    %v444 = vmul.f32 %v415, %v443
    %vm445 = vcmp.eq.f32.partialorder %v415, inf
    %v446 = vsel %vm445, %v415, %v444
    %vm447 = vcmp.eq.f32.partialorder %v415, 0.0
    %v448 = vand.u32 %v415, 2147483648
    %v449 = vsel %vm447, %v448, %v446
    %v450 = vrsqrt.pop %v416
    %v451 = vmul.f32 %v416, %v450
    %vm452 = vcmp.eq.f32.partialorder %v416, inf
    %v453 = vsel %vm452, %v416, %v451
    %vm454 = vcmp.eq.f32.partialorder %v416, 0.0
    %v455 = vand.u32 %v416, 2147483648
    %v456 = vsel %vm454, %v455, %v453
    %v457 = vrsqrt.pop %v417
    %v458 = vmul.f32 %v417, %v457
    %vm459 = vcmp.eq.f32.partialorder %v417, inf
    %v460 = vsel %vm459, %v417, %v458
    %vm461 = vcmp.eq.f32.partialorder %v417, 0.0
    %v462 = vand.u32 %v417, 2147483648
    %v463 = vsel %vm461, %v462, %v460
    %v464 = vrsqrt.pop %v418
    %v465 = vmul.f32 %v418, %v464
    %vm466 = vcmp.eq.f32.partialorder %v418, inf
    %v467 = vsel %vm466, %v418, %v465
    %vm468 = vcmp.eq.f32.partialorder %v418, 0.0
    %v469 = vand.u32 %v418, 2147483648
    %v470 = vsel %vm468, %v469, %v467
    %v471 = vrsqrt.pop %v419
    %v472 = vmul.f32 %v419, %v471
    %vm473 = vcmp.eq.f32.partialorder %v419, inf
    %v474 = vsel %vm473, %v419, %v472
    %vm475 = vcmp.eq.f32.partialorder %v419, 0.0
    %v476 = vand.u32 %v419, 2147483648
    %v477 = vsel %vm475, %v476, %v474
    %v478 = vrsqrt.pop %v420
    %v479 = vmul.f32 %v420, %v478
    %vm480 = vcmp.eq.f32.partialorder %v420, inf
    %v481 = vsel %vm480, %v420, %v479
    %vm482 = vcmp.eq.f32.partialorder %v420, 0.0
    %v483 = vand.u32 %v420, 2147483648
    %v484 = vsel %vm482, %v483, %v481
    %v485 = vrsqrt.pop %v421
    %v486 = vmul.f32 %v421, %v485
    %vm487 = vcmp.eq.f32.partialorder %v421, inf
    %v488 = vsel %vm487, %v421, %v486
    %vm489 = vcmp.eq.f32.partialorder %v421, 0.0
    %v490 = vand.u32 %v421, 2147483648
    %v491 = vsel %vm489, %v490, %v488
    %v492 = vrsqrt.pop %v422
    %v493 = vmul.f32 %v422, %v492
    %vm494 = vcmp.eq.f32.partialorder %v422, inf
    %v495 = vsel %vm494, %v422, %v493
    %vm496 = vcmp.eq.f32.partialorder %v422, 0.0
    %v497 = vand.u32 %v422, 2147483648
    %v498 = vsel %vm496, %v497, %v495
    %v499 = vrsqrt.pop %v423
    %v500 = vmul.f32 %v423, %v499
    %vm501 = vcmp.eq.f32.partialorder %v423, inf
    %v502 = vsel %vm501, %v423, %v500
    %vm503 = vcmp.eq.f32.partialorder %v423, 0.0
    %v504 = vand.u32 %v423, 2147483648
    %v505 = vsel %vm503, %v504, %v502
    %v506 = vrsqrt.pop %v424
    %v507 = vmul.f32 %v424, %v506
    %vm508 = vcmp.eq.f32.partialorder %v424, inf
    %v509 = vsel %vm508, %v424, %v507
    %vm510 = vcmp.eq.f32.partialorder %v424, 0.0
    %v511 = vand.u32 %v424, 2147483648
    %v512 = vsel %vm510, %v511, %v509
    %v513 = vrsqrt.pop %v425
    %v514 = vmul.f32 %v425, %v513
    %vm515 = vcmp.eq.f32.partialorder %v425, inf
    %v516 = vsel %vm515, %v425, %v514
    %vm517 = vcmp.eq.f32.partialorder %v425, 0.0
    %v518 = vand.u32 %v425, 2147483648
    %v519 = vsel %vm517, %v518, %v516
    %v520 = vrsqrt.pop %v426
    %v521 = vmul.f32 %v426, %v520
    %vm522 = vcmp.eq.f32.partialorder %v426, inf
    %v523 = vsel %vm522, %v426, %v521
    %vm524 = vcmp.eq.f32.partialorder %v426, 0.0
    %v525 = vand.u32 %v426, 2147483648
    %v526 = vsel %vm524, %v525, %v523
    %v527 = vrsqrt.pop %v427
    %v528 = vmul.f32 %v427, %v527
    %vm529 = vcmp.eq.f32.partialorder %v427, inf
    %v530 = vsel %vm529, %v427, %v528
    %vm531 = vcmp.eq.f32.partialorder %v427, 0.0
    %v532 = vand.u32 %v427, 2147483648
    %v533 = vsel %vm531, %v532, %v530
    %v534 = vrsqrt.pop %v428
    %v535 = vmul.f32 %v428, %v534
    %vm536 = vcmp.eq.f32.partialorder %v428, inf
    %v537 = vsel %vm536, %v428, %v535
    %vm538 = vcmp.eq.f32.partialorder %v428, 0.0
    %v539 = vand.u32 %v428, 2147483648
    %v540 = vsel %vm538, %v539, %v537
    %v541 = vld [vmem:[%s6] sm:$0xff]
    %v542 = vld [vmem:[%s6 + $0x8] sm:$0xff]
    %v543 = vld [vmem:[%s6 + $0x10] sm:$0xff]
    %v544 = vld [vmem:[%s6 + $0x18] sm:$0xff]
    %v545 = vld [vmem:[%s6 + $0x20] sm:$0xff]
    %v546 = vld [vmem:[%s6 + $0x28] sm:$0xff]
    %v547 = vld [vmem:[%s6 + $0x30] sm:$0xff]
    %v548 = vld [vmem:[%s6 + $0x38] sm:$0xff]
    %v549 = vld [vmem:[%s6 + $0x40] sm:$0xff]
    %v550 = vld [vmem:[%s6 + $0x48] sm:$0xff]
    %v551 = vld [vmem:[%s6 + $0x50] sm:$0xff]
    %v552 = vld [vmem:[%s6 + $0x58] sm:$0xff]
    %v553 = vld [vmem:[%s6 + $0x60] sm:$0xff]
    %v554 = vld [vmem:[%s6 + $0x68] sm:$0xff]
    %v555 = vld [vmem:[%s6 + $0x70] sm:$0xff]
    %v556 = vld [vmem:[%s6 + $0x78] sm:$0xff]
    %v557 = vld [vmem:[%s4] sm:$0xff]
    %v558 = vld [vmem:[%s4 + $0x8] sm:$0xff]
    %v559 = vld [vmem:[%s4 + $0x10] sm:$0xff]
    %v560 = vld [vmem:[%s4 + $0x18] sm:$0xff]
    %v561 = vld [vmem:[%s4 + $0x20] sm:$0xff]
    %v562 = vld [vmem:[%s4 + $0x28] sm:$0xff]
    %v563 = vld [vmem:[%s4 + $0x30] sm:$0xff]
    %v564 = vld [vmem:[%s4 + $0x38] sm:$0xff]
    %v565 = vld [vmem:[%s4 + $0x40] sm:$0xff]
    %v566 = vld [vmem:[%s4 + $0x48] sm:$0xff]
    %v567 = vld [vmem:[%s4 + $0x50] sm:$0xff]
    %v568 = vld [vmem:[%s4 + $0x58] sm:$0xff]
    %v569 = vld [vmem:[%s4 + $0x60] sm:$0xff]
    %v570 = vld [vmem:[%s4 + $0x68] sm:$0xff]
    %v571 = vld [vmem:[%s4 + $0x70] sm:$0xff]
    %v572 = vld [vmem:[%s4 + $0x78] sm:$0xff]
    %v573 = vld [vmem:[%s5] sm:$0x1]
    %574 = vset.pattern.permute.xlu0 0
    %575 = vperm.xlu0 %574, %v557
    %v576 = vpop.permute.xlu0 %575
    %577 = vset.pattern.permute.xlu0 0
    %578 = vperm.xlu0 %577, %v558
    %v579 = vpop.permute.xlu0 %578
    %580 = vset.pattern.permute.xlu0 0
    %581 = vperm.xlu0 %580, %v559
    %v582 = vpop.permute.xlu0 %581
    %583 = vset.pattern.permute.xlu0 0
    %584 = vperm.xlu0 %583, %v560
    %v585 = vpop.permute.xlu0 %584
    %586 = vset.pattern.permute.xlu0 0
    %587 = vperm.xlu0 %586, %v561
    %v588 = vpop.permute.xlu0 %587
    %589 = vset.pattern.permute.xlu0 0
    %590 = vperm.xlu0 %589, %v562
    %v591 = vpop.permute.xlu0 %590
    %592 = vset.pattern.permute.xlu0 0
    %593 = vperm.xlu0 %592, %v563
    %v594 = vpop.permute.xlu0 %593
    %595 = vset.pattern.permute.xlu0 0
    %596 = vperm.xlu0 %595, %v564
    %v597 = vpop.permute.xlu0 %596
    %598 = vset.pattern.permute.xlu0 0
    %599 = vperm.xlu0 %598, %v565
    %v600 = vpop.permute.xlu0 %599
    %601 = vset.pattern.permute.xlu0 0
    %602 = vperm.xlu0 %601, %v566
    %v603 = vpop.permute.xlu0 %602
    %604 = vset.pattern.permute.xlu0 0
    %605 = vperm.xlu0 %604, %v567
    %v606 = vpop.permute.xlu0 %605
    %607 = vset.pattern.permute.xlu0 0
    %608 = vperm.xlu0 %607, %v568
    %v609 = vpop.permute.xlu0 %608
    %610 = vset.pattern.permute.xlu0 0
    %611 = vperm.xlu0 %610, %v569
    %v612 = vpop.permute.xlu0 %611
    %613 = vset.pattern.permute.xlu0 0
    %614 = vperm.xlu0 %613, %v570
    %v615 = vpop.permute.xlu0 %614
    %616 = vset.pattern.permute.xlu0 0
    %617 = vperm.xlu0 %616, %v571
    %v618 = vpop.permute.xlu0 %617
    %619 = vset.pattern.permute.xlu0 0
    %620 = vperm.xlu0 %619, %v572
    %v621 = vpop.permute.xlu0 %620
    %v622 = vlaneseq
    %v623 = vshrl.u32 %v622, 7
    %v624 = vsub.s32 0, %v623
    %v625 = vrot.slane %v573, %v624
    %vm626 = vcmp.eq.s32.totalorder %v576, %v625
    %vm627 = vcmp.eq.s32.totalorder %v579, %v625
    %vm628 = vcmp.eq.s32.totalorder %v582, %v625
    %vm629 = vcmp.eq.s32.totalorder %v585, %v625
    %vm630 = vcmp.eq.s32.totalorder %v588, %v625
    %vm631 = vcmp.eq.s32.totalorder %v591, %v625
    %vm632 = vcmp.eq.s32.totalorder %v594, %v625
    %vm633 = vcmp.eq.s32.totalorder %v597, %v625
    %vm634 = vcmp.eq.s32.totalorder %v600, %v625
    %vm635 = vcmp.eq.s32.totalorder %v603, %v625
    %vm636 = vcmp.eq.s32.totalorder %v606, %v625
    %vm637 = vcmp.eq.s32.totalorder %v609, %v625
    %vm638 = vcmp.eq.s32.totalorder %v612, %v625
    %vm639 = vcmp.eq.s32.totalorder %v615, %v625
    %vm640 = vcmp.eq.s32.totalorder %v618, %v625
    %vm641 = vcmp.eq.s32.totalorder %v621, %v625
    %v642 = vsel %vm626, 1, 0
    %v643 = vsel %vm627, 1, 0
    %v644 = vsel %vm628, 1, 0
    %v645 = vsel %vm629, 1, 0
    %v646 = vsel %vm630, 1, 0
    %v647 = vsel %vm631, 1, 0
    %v648 = vsel %vm632, 1, 0
    %v649 = vsel %vm633, 1, 0
    %v650 = vsel %vm634, 1, 0
    %v651 = vsel %vm635, 1, 0
    %v652 = vsel %vm636, 1, 0
    %v653 = vsel %vm637, 1, 0
    %v654 = vsel %vm638, 1, 0
    %v655 = vsel %vm639, 1, 0
    %v656 = vsel %vm640, 1, 0
    %v657 = vsel %vm641, 1, 0
    %v658 = vcvt.s32.f32 %v642
    %v659 = vcvt.s32.f32 %v643
    %v660 = vcvt.s32.f32 %v644
    %v661 = vcvt.s32.f32 %v645
    %v662 = vcvt.s32.f32 %v646
    %v663 = vcvt.s32.f32 %v647
    %v664 = vcvt.s32.f32 %v648
    %v665 = vcvt.s32.f32 %v649
    %v666 = vcvt.s32.f32 %v650
    %v667 = vcvt.s32.f32 %v651
    %v668 = vcvt.s32.f32 %v652
    %v669 = vcvt.s32.f32 %v653
    %v670 = vcvt.s32.f32 %v654
    %v671 = vcvt.s32.f32 %v655
    %v672 = vcvt.s32.f32 %v656
    %v673 = vcvt.s32.f32 %v657
    %675 = vset.pattern.permute.xlu0 0
    %676 = vperm.xlu0 %675, %v541
    %v677 = vpop.permute.xlu0 %676
    %680 = vset.pattern.permute.xlu0 0
    %681 = vperm.xlu0 %680, %v542
    %v682 = vpop.permute.xlu0 %681
    %685 = vset.pattern.permute.xlu0 0
    %686 = vperm.xlu0 %685, %v543
    %v687 = vpop.permute.xlu0 %686
    %690 = vset.pattern.permute.xlu0 0
    %691 = vperm.xlu0 %690, %v544
    %v692 = vpop.permute.xlu0 %691
    %695 = vset.pattern.permute.xlu0 0
    %696 = vperm.xlu0 %695, %v545
    %v697 = vpop.permute.xlu0 %696
    %700 = vset.pattern.permute.xlu0 0
    %701 = vperm.xlu0 %700, %v546
    %v702 = vpop.permute.xlu0 %701
    %705 = vset.pattern.permute.xlu0 0
    %706 = vperm.xlu0 %705, %v547
    %v707 = vpop.permute.xlu0 %706
    %710 = vset.pattern.permute.xlu0 0
    %711 = vperm.xlu0 %710, %v548
    %v712 = vpop.permute.xlu0 %711
    %715 = vset.pattern.permute.xlu0 0
    %716 = vperm.xlu0 %715, %v549
    %v717 = vpop.permute.xlu0 %716
    %720 = vset.pattern.permute.xlu0 0
    %721 = vperm.xlu0 %720, %v550
    %v722 = vpop.permute.xlu0 %721
    %725 = vset.pattern.permute.xlu0 0
    %726 = vperm.xlu0 %725, %v551
    %v727 = vpop.permute.xlu0 %726
    %730 = vset.pattern.permute.xlu0 0
    %731 = vperm.xlu0 %730, %v552
    %v732 = vpop.permute.xlu0 %731
    %735 = vset.pattern.permute.xlu0 0
    %736 = vperm.xlu0 %735, %v553
    %v737 = vpop.permute.xlu0 %736
    %740 = vset.pattern.permute.xlu0 0
    %741 = vperm.xlu0 %740, %v554
    %v742 = vpop.permute.xlu0 %741
    %745 = vset.pattern.permute.xlu0 0
    %746 = vperm.xlu0 %745, %v555
    %v747 = vpop.permute.xlu0 %746
    %750 = vset.pattern.permute.xlu0 0
    %751 = vperm.xlu0 %750, %v556
    %v752 = vpop.permute.xlu0 %751
    %v754 = vmul.f32 %v658, %v677
    %v755 = vmul.f32 %v659, %v682
    %v756 = vmul.f32 %v660, %v687
    %v757 = vmul.f32 %v661, %v692
    %v758 = vmul.f32 %v662, %v697
    %v759 = vmul.f32 %v663, %v702
    %v760 = vmul.f32 %v664, %v707
    %v761 = vmul.f32 %v665, %v712
    %v762 = vmul.f32 %v666, %v717
    %v763 = vmul.f32 %v667, %v722
    %v764 = vmul.f32 %v668, %v727
    %v765 = vmul.f32 %v669, %v732
    %v766 = vmul.f32 %v670, %v737
    %v767 = vmul.f32 %v671, %v742
    %v768 = vmul.f32 %v672, %v747
    %v769 = vmul.f32 %v673, %v752
    %v770 = vsub.f32 %v677, %v754
    %v771 = vsub.f32 %v682, %v755
    %v772 = vsub.f32 %v687, %v756
    %v773 = vsub.f32 %v692, %v757
    %v774 = vsub.f32 %v697, %v758
    %v775 = vsub.f32 %v702, %v759
    %v776 = vsub.f32 %v707, %v760
    %v777 = vsub.f32 %v712, %v761
    %v778 = vsub.f32 %v717, %v762
    %v779 = vsub.f32 %v722, %v763
    %v780 = vsub.f32 %v727, %v764
    %v781 = vsub.f32 %v732, %v765
    %v782 = vsub.f32 %v737, %v766
    %v783 = vsub.f32 %v742, %v767
    %v784 = vsub.f32 %v747, %v768
    %v785 = vsub.f32 %v752, %v769
    %v786 = vmul.f32 %v435, %v754
    %v787 = vmul.f32 %v442, %v755
    %v788 = vmul.f32 %v449, %v756
    %v789 = vmul.f32 %v456, %v757
    %v790 = vmul.f32 %v463, %v758
    %v791 = vmul.f32 %v470, %v759
    %v792 = vmul.f32 %v477, %v760
    %v793 = vmul.f32 %v484, %v761
    %v794 = vmul.f32 %v491, %v762
    %v795 = vmul.f32 %v498, %v763
    %v796 = vmul.f32 %v505, %v764
    %v797 = vmul.f32 %v512, %v765
    %v798 = vmul.f32 %v519, %v766
    %v799 = vmul.f32 %v526, %v767
    %v800 = vmul.f32 %v533, %v768
    %v801 = vmul.f32 %v540, %v769
    %v802 = vmul.f32 %v435, %v770
    %v803 = vmul.f32 %v442, %v771
    %v804 = vmul.f32 %v449, %v772
    %v805 = vmul.f32 %v456, %v773
    %v806 = vmul.f32 %v463, %v774
    %v807 = vmul.f32 %v470, %v775
    %v808 = vmul.f32 %v477, %v776
    %v809 = vmul.f32 %v484, %v777
    %v810 = vmul.f32 %v491, %v778
    %v811 = vmul.f32 %v498, %v779
    %v812 = vmul.f32 %v505, %v780
    %v813 = vmul.f32 %v512, %v781
    %v814 = vmul.f32 %v519, %v782
    %v815 = vmul.f32 %v526, %v783
    %v816 = vmul.f32 %v533, %v784
    %v817 = vmul.f32 %v540, %v785
    %v818 = vld [vmem:[#allocation2] sm:$0x1]
    %v819 = vmax.f32 %v786, %v790
    %v820 = vmax.f32 %v787, %v791
    %v821 = vmax.f32 %v788, %v792
    %v822 = vmax.f32 %v789, %v793
    %v823 = vmax.f32 %v819, %v794
    %v824 = vmax.f32 %v820, %v795
    %v825 = vmax.f32 %v821, %v796
    %v826 = vmax.f32 %v822, %v797
    %v827 = vmax.f32 %v823, %v798
    %v828 = vmax.f32 %v824, %v799
    %v829 = vmax.f32 %v825, %v800
    %v830 = vmax.f32 %v826, %v801
    %v831 = vmax.f32 %v827, %v828
    %v832 = vmax.f32 %v829, %v830
    %v833 = vmax.f32 %v831, %v832
    %v834 = vrot.slane %v833, 4
    %v835 = vmax.f32 %v833, %v834
    %v836 = vrot.slane %v835, 2
    %v837 = vmax.f32 %v835, %v836
    %v838 = vrot.slane %v837, 1
    %v839 = vmax.f32 %v837, %v838
    %v840 = vmax.f32 %v818, %v839
    %v841 = vsub.f32 %v818, %v840
    %v842 = vmul.f32 %v841, 1.442695
    %v843 = vpow.pop %v842
    %v844 = vsub.f32 %v786, %v802
    %v845 = vsub.f32 %v787, %v803
    %v846 = vsub.f32 %v788, %v804
    %v847 = vsub.f32 %v789, %v805
    %v848 = vsub.f32 %v790, %v806
    %v849 = vsub.f32 %v791, %v807
    %v850 = vsub.f32 %v792, %v808
    %v851 = vsub.f32 %v793, %v809
    %v852 = vsub.f32 %v794, %v810
    %v853 = vsub.f32 %v795, %v811
    %v854 = vsub.f32 %v796, %v812
    %v855 = vsub.f32 %v797, %v813
    %v856 = vsub.f32 %v798, %v814
    %v857 = vsub.f32 %v799, %v815
    %v858 = vsub.f32 %v800, %v816
    %v859 = vsub.f32 %v801, %v817
    %v861 = vlaneseq
    %v862 = vshrl.u32 %v861, 7
    %v863 = vsub.s32 0, %v862
    %v864 = vrot.slane %v840, %v863
    %v866 = vmul.f32 %v864, %v754
    %v867 = vmul.f32 %v864, %v755
    %v868 = vmul.f32 %v864, %v756
    %v869 = vmul.f32 %v864, %v757
    %v870 = vmul.f32 %v864, %v758
    %v871 = vmul.f32 %v864, %v759
    %v872 = vmul.f32 %v864, %v760
    %v873 = vmul.f32 %v864, %v761
    %v874 = vmul.f32 %v864, %v762
    %v875 = vmul.f32 %v864, %v763
    %v876 = vmul.f32 %v864, %v764
    %v877 = vmul.f32 %v864, %v765
    %v878 = vmul.f32 %v864, %v766
    %v879 = vmul.f32 %v864, %v767
    %v880 = vmul.f32 %v864, %v768
    %v881 = vmul.f32 %v864, %v769
    %v882 = vsub.f32 %v844, %v866
    %v883 = vsub.f32 %v845, %v867
    %v884 = vsub.f32 %v846, %v868
    %v885 = vsub.f32 %v847, %v869
    %v886 = vsub.f32 %v848, %v870
    %v887 = vsub.f32 %v849, %v871
    %v888 = vsub.f32 %v850, %v872
    %v889 = vsub.f32 %v851, %v873
    %v890 = vsub.f32 %v852, %v874
    %v891 = vsub.f32 %v853, %v875
    %v892 = vsub.f32 %v854, %v876
    %v893 = vsub.f32 %v855, %v877
    %v894 = vsub.f32 %v856, %v878
    %v895 = vsub.f32 %v857, %v879
    %v896 = vsub.f32 %v858, %v880
    %v897 = vsub.f32 %v859, %v881
    %v898 = vmul.f32 %v882, 1.442695
    %v899 = vpow.pop %v898
    %v900 = vmul.f32 %v883, 1.442695
    %v901 = vpow.pop %v900
    %v902 = vmul.f32 %v884, 1.442695
    %v903 = vpow.pop %v902
    %v904 = vmul.f32 %v885, 1.442695
    %v905 = vpow.pop %v904
    %v906 = vmul.f32 %v886, 1.442695
    %v907 = vpow.pop %v906
    %v908 = vmul.f32 %v887, 1.442695
    %v909 = vpow.pop %v908
    %v910 = vmul.f32 %v888, 1.442695
    %v911 = vpow.pop %v910
    %v912 = vmul.f32 %v889, 1.442695
    %v913 = vpow.pop %v912
    %v914 = vmul.f32 %v890, 1.442695
    %v915 = vpow.pop %v914
    %v916 = vmul.f32 %v891, 1.442695
    %v917 = vpow.pop %v916
    %v918 = vmul.f32 %v892, 1.442695
    %v919 = vpow.pop %v918
    %v920 = vmul.f32 %v893, 1.442695
    %v921 = vpow.pop %v920
    %v922 = vmul.f32 %v894, 1.442695
    %v923 = vpow.pop %v922
    %v924 = vmul.f32 %v895, 1.442695
    %v925 = vpow.pop %v924
    %v926 = vmul.f32 %v896, 1.442695
    %v927 = vpow.pop %v926
    %v928 = vmul.f32 %v897, 1.442695
    %v929 = vpow.pop %v928
    %v930 = vmul.f32 %v899, %v754
    %v931 = vmul.f32 %v901, %v755
    %v932 = vmul.f32 %v903, %v756
    %v933 = vmul.f32 %v905, %v757
    %v934 = vmul.f32 %v907, %v758
    %v935 = vmul.f32 %v909, %v759
    %v936 = vmul.f32 %v911, %v760
    %v937 = vmul.f32 %v913, %v761
    %v938 = vmul.f32 %v915, %v762
    %v939 = vmul.f32 %v917, %v763
    %v940 = vmul.f32 %v919, %v764
    %v941 = vmul.f32 %v921, %v765
    %v942 = vmul.f32 %v923, %v766
    %v943 = vmul.f32 %v925, %v767
    %v944 = vmul.f32 %v927, %v768
    %v945 = vmul.f32 %v929, %v769
    %v946 = vmul.f32 %v899, %v770
    %v947 = vmul.f32 %v901, %v771
    %v948 = vmul.f32 %v903, %v772
    %v949 = vmul.f32 %v905, %v773
    %v950 = vmul.f32 %v907, %v774
    %v951 = vmul.f32 %v909, %v775
    %v952 = vmul.f32 %v911, %v776
    %v953 = vmul.f32 %v913, %v777
    %v954 = vmul.f32 %v915, %v778
    %v955 = vmul.f32 %v917, %v779
    %v956 = vmul.f32 %v919, %v780
    %v957 = vmul.f32 %v921, %v781
    %v958 = vmul.f32 %v923, %v782
    %v959 = vmul.f32 %v925, %v783
    %v960 = vmul.f32 %v927, %v784
    %v961 = vmul.f32 %v929, %v785
    %v962 = vld [vmem:[#allocation3] sm:$0x1]
    %v963 = vmul.f32 %v962, %v843
    %v964 = vadd.f32 %v930, %v931
    %v965 = vadd.f32 %v964, %v932
    %v966 = vadd.f32 %v965, %v933
    %v967 = vadd.f32 %v966, %v934
    %v968 = vadd.f32 %v967, %v935
    %v969 = vadd.f32 %v968, %v936
    %v970 = vadd.f32 %v969, %v937
    %v971 = vadd.f32 %v970, %v938
    %v972 = vadd.f32 %v971, %v939
    %v973 = vadd.f32 %v972, %v940
    %v974 = vadd.f32 %v973, %v941
    %v975 = vadd.f32 %v974, %v942
    %v976 = vadd.f32 %v975, %v943
    %v977 = vadd.f32 %v976, %v944
    %v978 = vadd.f32 %v977, %v945
    %v979 = vrot.slane %v978, 4
    %v980 = vadd.f32 %v978, %v979
    %v981 = vrot.slane %v980, 2
    %v982 = vadd.f32 %v980, %v981
    %v983 = vrot.slane %v982, 1
    %v984 = vadd.f32 %v982, %v983
    %v985 = vadd.f32 %v963, %v984
    %986 = vst [vmem:[#allocation3] sm:$0x1] %v985
    %v987 = vld [vmem:[#allocation4] sm:$0x1]
    %v988 = vmul.f32 %v987, %v843
    %v989 = vmul.f32 %v435, %v930
    %v990 = vmul.f32 %v442, %v931
    %v991 = vmul.f32 %v449, %v932
    %v992 = vmul.f32 %v456, %v933
    %v993 = vmul.f32 %v463, %v934
    %v994 = vmul.f32 %v470, %v935
    %v995 = vmul.f32 %v477, %v936
    %v996 = vmul.f32 %v484, %v937
    %v997 = vmul.f32 %v491, %v938
    %v998 = vmul.f32 %v498, %v939
    %v999 = vmul.f32 %v505, %v940
    %v1000 = vmul.f32 %v512, %v941
    %v1001 = vmul.f32 %v519, %v942
    %v1002 = vmul.f32 %v526, %v943
    %v1003 = vmul.f32 %v533, %v944
    %v1004 = vmul.f32 %v540, %v945
    %v1005 = vadd.f32 %v989, %v990
    %v1006 = vadd.f32 %v1005, %v991
    %v1007 = vadd.f32 %v1006, %v992
    %v1008 = vadd.f32 %v1007, %v993
    %v1009 = vadd.f32 %v1008, %v994
    %v1010 = vadd.f32 %v1009, %v995
    %v1011 = vadd.f32 %v1010, %v996
    %v1012 = vadd.f32 %v1011, %v997
    %v1013 = vadd.f32 %v1012, %v998
    %v1014 = vadd.f32 %v1013, %v999
    %v1015 = vadd.f32 %v1014, %v1000
    %v1016 = vadd.f32 %v1015, %v1001
    %v1017 = vadd.f32 %v1016, %v1002
    %v1018 = vadd.f32 %v1017, %v1003
    %v1019 = vadd.f32 %v1018, %v1004
    %v1020 = vrot.slane %v1019, 4
    %v1021 = vadd.f32 %v1019, %v1020
    %v1022 = vrot.slane %v1021, 2
    %v1023 = vadd.f32 %v1021, %v1022
    %v1024 = vrot.slane %v1023, 1
    %v1025 = vadd.f32 %v1023, %v1024
    %v1026 = vadd.f32 %v988, %v1025
    %1027 = vst [vmem:[#allocation4] sm:$0x1] %v1026
    %1028 = vst [vmem:[#allocation2] sm:$0x1] %v840
    %v1029 = vld [vmem:[#allocation5] sm:$0x1]
    %v1030 = vadd.f32 %v946, %v947
    %v1031 = vadd.f32 %v1030, %v948
    %v1032 = vadd.f32 %v1031, %v949
    %v1033 = vadd.f32 %v1032, %v950
    %v1034 = vadd.f32 %v1033, %v951
    %v1035 = vadd.f32 %v1034, %v952
    %v1036 = vadd.f32 %v1035, %v953
    %v1037 = vadd.f32 %v1036, %v954
    %v1038 = vadd.f32 %v1037, %v955
    %v1039 = vadd.f32 %v1038, %v956
    %v1040 = vadd.f32 %v1039, %v957
    %v1041 = vadd.f32 %v1040, %v958
    %v1042 = vadd.f32 %v1041, %v959
    %v1043 = vadd.f32 %v1042, %v960
    %v1044 = vadd.f32 %v1043, %v961
    %v1045 = vrot.slane %v1044, 4
    %v1046 = vadd.f32 %v1044, %v1045
    %v1047 = vrot.slane %v1046, 2
    %v1048 = vadd.f32 %v1046, %v1047
    %v1049 = vrot.slane %v1048, 1
    %v1050 = vadd.f32 %v1048, %v1049
    %v1051 = vadd.f32 %v1029, %v1050
    %1052 = vst [vmem:[#allocation5] sm:$0x1] %v1051
    %v1053 = vld [vmem:[#allocation6] sm:$0x1]
    %v1054 = vmul.f32 %v435, %v946
    %v1055 = vmul.f32 %v442, %v947
    %v1056 = vmul.f32 %v449, %v948
    %v1057 = vmul.f32 %v456, %v949
    %v1058 = vmul.f32 %v463, %v950
    %v1059 = vmul.f32 %v470, %v951
    %v1060 = vmul.f32 %v477, %v952
    %v1061 = vmul.f32 %v484, %v953
    %v1062 = vmul.f32 %v491, %v954
    %v1063 = vmul.f32 %v498, %v955
    %v1064 = vmul.f32 %v505, %v956
    %v1065 = vmul.f32 %v512, %v957
    %v1066 = vmul.f32 %v519, %v958
    %v1067 = vmul.f32 %v526, %v959
    %v1068 = vmul.f32 %v533, %v960
    %v1069 = vmul.f32 %v540, %v961
    %v1070 = vadd.f32 %v1054, %v1055
    %v1071 = vadd.f32 %v1070, %v1056
    %v1072 = vadd.f32 %v1071, %v1057
    %v1073 = vadd.f32 %v1072, %v1058
    %v1074 = vadd.f32 %v1073, %v1059
    %v1075 = vadd.f32 %v1074, %v1060
    %v1076 = vadd.f32 %v1075, %v1061
    %v1077 = vadd.f32 %v1076, %v1062
    %v1078 = vadd.f32 %v1077, %v1063
    %v1079 = vadd.f32 %v1078, %v1064
    %v1080 = vadd.f32 %v1079, %v1065
    %v1081 = vadd.f32 %v1080, %v1066
    %v1082 = vadd.f32 %v1081, %v1067
    %v1083 = vadd.f32 %v1082, %v1068
    %v1084 = vadd.f32 %v1083, %v1069
    %v1085 = vrot.slane %v1084, 4
    %v1086 = vadd.f32 %v1084, %v1085
    %v1087 = vrot.slane %v1086, 2
    %v1088 = vadd.f32 %v1086, %v1087
    %v1089 = vrot.slane %v1088, 1
    %v1090 = vadd.f32 %v1088, %v1089
    %v1091 = vadd.f32 %v1053, %v1090
    %1092 = vst [vmem:[#allocation6] sm:$0x1] %v1091
    // Predicated region
    $region34: #{tpu_custom_call.1} parent=1 // pred_check
      %p1093 = pneg %p28
    $region35: #{tpu_custom_call.1} parent=1 // pred_check_branch
      %1095 = sbr.rel (%p1093) target = $region37
    $region36: #{tpu_custom_call.1} parent=1 // pred_region
      %v1096 = vld [vmem:[#allocation4] sm:$0x1]
      %v1097 = vld [vmem:[#allocation3] sm:$0x1]
      %v1098 = vadd.f32 %v1097, 1e-06
      %v1099 = vrcp.pop %v1098
      %v1100 = vmul.f32 %v1096, %v1099
      %v1101 = vld [vmem:[#allocation6] sm:$0x1]
      %v1102 = vld [vmem:[#allocation5] sm:$0x1]
      %v1103 = vadd.f32 %v1102, 1e-06
      %v1104 = vrcp.pop %v1103
      %v1105 = vmul.f32 %v1101, %v1104
      %v1106 = vsub.f32 %v1105, %v1100
      %1107 = vst [vmem:[#allocation7] sm:$0x1] %v1106
    $region37: #{tpu_custom_call.1} parent=1 // pred_fallthru
      _
    // Predicated region
    $region38: #{tpu_custom_call.1} parent=1 // pred_check
      _
    $region39: #{tpu_custom_call.1} parent=1 // pred_check_branch
      %1109 = sbr.rel (0) target = $region41
    $region40: #{tpu_custom_call.1} parent=1 // pred_region
      %s1111 = ssub.s32 16, 16
      %1112 = vsyncadd [#allocation8], %s1111
      %s1114 = sshll.u32 [#allocation7], 4
      %s1115 = int_to_ptr.vmem [resolvable:$true] %s1114
      %1117 = dma.vmem_to_hbm [thread:$0]  %s1115, 16, %s7, [#allocation8]
    $region41: #{tpu_custom_call.1} parent=1 // pred_fallthru
      _
    // Predicated region
    $region42: #{tpu_custom_call.1} parent=1 // pred_check
      _
    $region43: #{tpu_custom_call.1} parent=1 // pred_check_branch
      %1119 = sbr.rel (0) target = $region45
    $region44: #{tpu_custom_call.1} parent=1 // pred_region
      %1120 = dma.done [#allocation8], 16
    $region45: #{tpu_custom_call.1} parent=1 // pred_fallthru
      _
    %1121 = vsyncpa [#allocation8], 1

</llo_original>
